<compile_context>
chip_gen: v5e
topology: v5e:2x2
jax: 0.10.0
libtpu: 0.0.40
codegen_flags: <defaults>
</compile_context>

<pallas_src>
import functools

import jax
import jax.numpy as jnp
from jax.experimental import pallas as pl
from jax.experimental.pallas import tpu as pltpu


def _circle_loss_kernel(logits_ref, labels_ref, thr_ref, out_ref,
                        neg_acc, pos_acc, *,
                        temperature, binary_labels, acc_rows):
    ni = pl.program_id(1)                       # reduction (N) step, last axis
    t = jnp.float32(temperature)

    @pl.when(ni == 0)
    def _init():
        neg_acc[...] = jnp.zeros_like(neg_acc)
        pos_acc[...] = jnp.zeros_like(pos_acc)

    logits = logits_ref[...].astype(jnp.float32)      # (tn, tc)
    tn, tc = logits.shape

    if binary_labels:
        # Single EUP exp per element; labels assumed in {0, 1}.
        is_neg = labels_ref[...].astype(jnp.int32) == 0
        e = jnp.exp(t * jnp.where(is_neg, logits, -logits))
        one = jnp.float32(1.0)
        neg_term = jnp.where(is_neg, e, one)          # exp(t*(1-l)*x)
        pos_term = jnp.where(is_neg, one, e)          # exp(-t*l*x)
    else:
        # General soft-label path, temperature multiply folded/reused.
        labels = labels_ref[...].astype(jnp.float32)
        tl = t * logits
        tp = labels * tl
        neg_term = jnp.exp(tl - tp)                   # exp(t*(1-l)*x)
        pos_term = jnp.exp(-tp)                       # exp(-t*l*x)

    # Hot loop: reduce to (acc_rows, tc) with pure whole-vreg VPU adds, then a
    # single small accumulate (no cross-sublane work here).
    if tn == acc_rows:
        neg_acc[...] += neg_term
        pos_acc[...] += pos_term
    else:
        g = tn // acc_rows
        neg_acc[...] += neg_term.reshape(g, acc_rows, tc).sum(axis=0)
        pos_acc[...] += pos_term.reshape(g, acc_rows, tc).sum(axis=0)

    @pl.when(ni == pl.num_programs(1) - 1)
    def _finalize():
        thr = thr_ref[...].astype(jnp.float32)                  # (1, tc)
        neg_sum = jnp.sum(neg_acc[...], axis=0, keepdims=True)  # XLU, once
        pos_sum = jnp.sum(pos_acc[...], axis=0, keepdims=True)
        out_ref[...] = (jnp.log(jnp.exp(t * thr) + neg_sum + 1e-10)
                        + jnp.log(jnp.exp(-t * thr) + pos_sum + 1e-10))


def _sublane_base(dtype):
    """Minimum second-minor tile multiple for a dtype (f32:8, bf16:16, i8:32)."""
    return max(8, 32 // jnp.dtype(dtype).itemsize)


def _pick_tile(dim, base, cap):
    """Largest divisor of `dim` that is a multiple of `base` and <= cap.
    Returns None if `dim` is not a multiple of `base`."""
    if dim % base != 0:
        return None
    best = base
    limit = min(dim, max(cap, base))
    t = base
    while t <= limit:
        if dim % t == 0:
            best = t
        t += base
    return best


def circle_loss(logits, labels, thresholds, temperature=0.03,
                tile_n=None, tile_c=None, binary_labels=None):
    logits = jnp.asarray(logits)
    labels = jnp.asarray(labels)
    thresholds = jnp.asarray(thresholds)

    if labels.dtype == jnp.bool_:
        labels = labels.astype(jnp.int8)          # keep a 1 B/elem stream
    if binary_labels is None:
        binary_labels = bool(jnp.issubdtype(labels.dtype, jnp.integer))

    n, c = logits.shape
    assert labels.shape == (n, c), (labels.shape, logits.shape)
    thr2d = thresholds.reshape(1, c).astype(jnp.float32)

    # --- Tile selection -----------------------------------------------------
    base_n = max(_sublane_base(logits.dtype), _sublane_base(labels.dtype))
    if tile_n is None:
        tn = _pick_tile(n, base_n, 512)
        if tn is None:
            tn = n                                # full-extent fallback (capped)
    else:
        tn = tile_n
    if tile_c is None:
        cap_c = min(1024, c // 2) if c >= 256 else 1024   # >=2 C tiles if possible
        tc = _pick_tile(c, 128, cap_c)
        if tc is None:
            tc = c                                # full-extent fallback (capped)
    else:
        tc = tile_c
    assert n % tn == 0 and c % tc == 0, (n, c, tn, tc)

    in_tile_bytes = tn * tc * (logits.dtype.itemsize + labels.dtype.itemsize)
    if in_tile_bytes > (8 << 20):
        # TODO(synk): pad + mask ragged N/C instead of refusing oversized
        # full-extent fallback blocks.
        raise ValueError(
            f"Circle_Loss tile ({tn}x{tc}) needs {in_tile_bytes} input bytes; "
            "pad N to a multiple of 8/16/32 (dtype-dependent) and C to a "
            "multiple of 128 before calling circle_loss.")

    acc_rows = 8 if tn % 8 == 0 else tn
    grid = (c // tc, n // tn)                     # parallel C axis, reduction N last

    # --- Explicit scoped-VMEM budget (double-buffered inputs + scratch) -----
    vmem_bytes = 2 * in_tile_bytes                # 2 buffers per input stream
    vmem_bytes += 2 * acc_rows * tc * 4           # two f32 accumulators
    vmem_bytes += 2 * 2 * tc * 4 * 2              # thr + out blocks, 2 buffers
    vmem_bytes = int(min(max(2 * vmem_bytes, 4 << 20), 24 << 20))

    kernel = functools.partial(
        _circle_loss_kernel,
        temperature=float(temperature),
        binary_labels=binary_labels,
        acc_rows=acc_rows,
    )

    loss_row = pl.pallas_call(
        kernel,
        out_shape=jax.ShapeDtypeStruct((1, c), jnp.float32),
        grid_spec=pltpu.PrefetchScalarGridSpec(
            num_scalar_prefetch=0,
            grid=grid,
            in_specs=[
                pl.BlockSpec((tn, tc), lambda ci, ni: (ni, ci)),
                pl.BlockSpec((tn, tc), lambda ci, ni: (ni, ci)),
                pl.BlockSpec((1, tc), lambda ci, ni: (0, ci)),
            ],
            out_specs=pl.BlockSpec((1, tc), lambda ci, ni: (0, ci)),
            scratch_shapes=[
                pltpu.VMEM((acc_rows, tc), jnp.float32),
                pltpu.VMEM((acc_rows, tc), jnp.float32),
            ],
        ),
        compiler_params=pltpu.CompilerParams(
            dimension_semantics=("parallel", "arbitrary"),
            vmem_limit_bytes=vmem_bytes,
        ),
    )(logits, labels, thr2d)

    return jnp.mean(loss_row)


def circle_loss_ref(logits, labels, thresholds, temperature=0.03):
    negative = (1.0 - labels) * logits
    positive = labels * logits
    loss = (jnp.log(jnp.exp(temperature * thresholds)
                    + jnp.sum(jnp.exp(temperature * negative), axis=0) + 1e-10)
            + jnp.log(jnp.exp(-temperature * thresholds)
                      + jnp.sum(jnp.exp(-temperature * positive), axis=0) + 1e-10))
    return jnp.mean(loss)


if __name__ == "__main__":
    key = jax.random.PRNGKey(0)
    k1, k2, k3 = jax.random.split(key, 3)

    N, C = 64, 256   # batch rows (summed over), class columns
    logits = jax.random.normal(k1, (N, C), dtype=jnp.float32)
    labels_f = (jax.random.uniform(k2, (N, C)) < 0.3).astype(jnp.float32)
    labels_i8 = labels_f.astype(jnp.int8)
    thresholds = jax.random.normal(k3, (C,), dtype=jnp.float32) * 0.1

    ref = circle_loss_ref(logits, labels_f, thresholds)

    # Binary-label fast path: int8 labels stream, one exp per element.
    # Forced (32, 128) tiles give a real (2, 2) grid (>=2 parallel C tiles) and
    # exercise the accumulate/finalize path; at large shapes tiles auto-pick.
    out_bin = circle_loss(logits, labels_i8, thresholds, tile_n=32, tile_c=128)
    out_bin = jax.block_until_ready(out_bin)
    assert jnp.allclose(out_bin, ref, atol=1e-5, rtol=1e-5), (out_bin, ref)

    # General soft-label path: float labels, exact reference math.
    out_soft = circle_loss(logits, labels_f, thresholds, tile_n=32, tile_c=128)
    out_soft = jax.block_until_ready(out_soft)
    assert jnp.allclose(out_soft, ref, atol=1e-5, rtol=1e-5), (out_soft, ref)

    print("KERNEL_OK")
</pallas_src>

<mosaic_0001>
module attributes {stable_mosaic.version = 11 : i64} {
  func.func @_circle_loss_kernel(%arg0: i32, %arg1: i32, %arg2: memref<32x128xf32, #tpu.memory_space<vmem>>, %arg3: memref<32x128xi8, #tpu.memory_space<vmem>>, %arg4: memref<1x128xf32, #tpu.memory_space<vmem>>, %arg5: memref<1x128xf32, #tpu.memory_space<vmem>>, %arg6: memref<8x128xf32, #tpu.memory_space<vmem>>, %arg7: memref<8x128xf32, #tpu.memory_space<vmem>>) attributes {dimension_semantics = [#tpu.dimension_semantics<parallel>, #tpu.dimension_semantics<arbitrary>], iteration_bounds = array<i64: 2, 2>, scalar_prefetch = 0 : i64, scratch_operands = 2 : i64, tpu.core_type = #tpu.core_type<tc>, window_params = [{transform_indices = @transform_0, window_bounds = array<i64: 32, 128>}, {transform_indices = @transform_1, window_bounds = array<i64: 32, 128>}, {transform_indices = @transform_2, window_bounds = array<i64: 1, 128>}, {transform_indices = @transform_3, window_bounds = array<i64: 1, 128>}]} {
    %c0_i32 = arith.constant 0 : i32
    %0 = arith.cmpi eq, %arg1, %c0_i32 : i32
    %1 = arith.extui %0 : i1 to i32
    %c0_i32_0 = arith.constant 0 : i32
    %2 = arith.cmpi ne, %1, %c0_i32_0 : i32
    scf.if %2 {
      %cst_20 = arith.constant 0.000000e+00 : f32
      %31 = vector.broadcast %cst_20 : f32 to vector<8x128xf32>
      %c0_21 = arith.constant 0 : index
      %c0_22 = arith.constant 0 : index
      %32 = vector.load %arg6[%c0_21, %c0_22] : memref<8x128xf32, #tpu.memory_space<vmem>>, vector<8x128xf32>
      tpu.vector_store %arg6[%c0_21, %c0_22], %31 {strides = array<i32>} : memref<8x128xf32, #tpu.memory_space<vmem>>, vector<8x128xf32>,
      %cst_23 = arith.constant 0.000000e+00 : f32
      %33 = vector.broadcast %cst_23 : f32 to vector<8x128xf32>
      %c0_24 = arith.constant 0 : index
      %c0_25 = arith.constant 0 : index
      %34 = vector.load %arg7[%c0_24, %c0_25] : memref<8x128xf32, #tpu.memory_space<vmem>>, vector<8x128xf32>
      tpu.vector_store %arg7[%c0_24, %c0_25], %33 {strides = array<i32>} : memref<8x128xf32, #tpu.memory_space<vmem>>, vector<8x128xf32>,
    } else {
    }
    %c0 = arith.constant 0 : index
    %c0_1 = arith.constant 0 : index
    %3 = vector.load %arg2[%c0, %c0_1] : memref<32x128xf32, #tpu.memory_space<vmem>>, vector<32x128xf32>
    %c0_2 = arith.constant 0 : index
    %c0_3 = arith.constant 0 : index
    %4 = vector.load %arg3[%c0_2, %c0_3] : memref<32x128xi8, #tpu.memory_space<vmem>>, vector<32x128xi8>
    %5 = arith.extsi %4 : vector<32x128xi8> to vector<32x128xi32>
    %c0_i32_4 = arith.constant 0 : i32
    %6 = vector.broadcast %c0_i32_4 : i32 to vector<32x128xi32>
    %7 = arith.cmpi eq, %5, %6 : vector<32x128xi32>
    %cst = arith.constant 0.000000e+00 : f32
    %8 = vector.broadcast %cst : f32 to vector<32x128xf32>
    %9 = arith.subf %8, %3 : vector<32x128xf32>
    %10 = arith.select %7, %3, %9 : vector<32x128xi1>, vector<32x128xf32>
    %cst_5 = arith.constant 3.000000e-02 : f32
    %11 = vector.broadcast %cst_5 : f32 to vector<32x128xf32>
    %12 = arith.mulf %11, %10 : vector<32x128xf32>
    %13 = math.exp %12 : vector<32x128xf32>
    %cst_6 = arith.constant 1.000000e+00 : f32
    %14 = vector.broadcast %cst_6 : f32 to vector<32x128xf32>
    %15 = arith.select %7, %13, %14 : vector<32x128xi1>, vector<32x128xf32>
    %cst_7 = arith.constant 1.000000e+00 : f32
    %16 = vector.broadcast %cst_7 : f32 to vector<32x128xf32>
    %17 = arith.select %7, %16, %13 : vector<32x128xi1>, vector<32x128xf32>
    %c0_8 = arith.constant 0 : index
    %c0_9 = arith.constant 0 : index
    %18 = vector.load %arg6[%c0_8, %c0_9] : memref<8x128xf32, #tpu.memory_space<vmem>>, vector<8x128xf32>
    %19 = vector.shape_cast %15 : vector<32x128xf32> to vector<4x8x128xf32>
    %cst_10 = arith.constant dense<0.000000e+00> : vector<8x128xf32>
    %20 = vector.multi_reduction <add>, %19, %cst_10 [0] : vector<4x8x128xf32> to vector<8x128xf32>
    %21 = arith.addf %18, %20 : vector<8x128xf32>
    %c0_11 = arith.constant 0 : index
    %c0_12 = arith.constant 0 : index
    %22 = vector.load %arg6[%c0_11, %c0_12] : memref<8x128xf32, #tpu.memory_space<vmem>>, vector<8x128xf32>
    tpu.vector_store %arg6[%c0_11, %c0_12], %21 {strides = array<i32>} : memref<8x128xf32, #tpu.memory_space<vmem>>, vector<8x128xf32>,
    %c0_13 = arith.constant 0 : index
    %c0_14 = arith.constant 0 : index
    %23 = vector.load %arg7[%c0_13, %c0_14] : memref<8x128xf32, #tpu.memory_space<vmem>>, vector<8x128xf32>
    %24 = vector.shape_cast %17 : vector<32x128xf32> to vector<4x8x128xf32>
    %cst_15 = arith.constant dense<0.000000e+00> : vector<8x128xf32>
    %25 = vector.multi_reduction <add>, %24, %cst_15 [0] : vector<4x8x128xf32> to vector<8x128xf32>
    %26 = arith.addf %23, %25 : vector<8x128xf32>
    %c0_16 = arith.constant 0 : index
    %c0_17 = arith.constant 0 : index
    %27 = vector.load %arg7[%c0_16, %c0_17] : memref<8x128xf32, #tpu.memory_space<vmem>>, vector<8x128xf32>
    tpu.vector_store %arg7[%c0_16, %c0_17], %26 {strides = array<i32>} : memref<8x128xf32, #tpu.memory_space<vmem>>, vector<8x128xf32>,
    %c1_i32 = arith.constant 1 : i32
    %28 = arith.cmpi eq, %arg1, %c1_i32 : i32
    %29 = arith.extui %28 : i1 to i32
    %cst_18 = arith.constant 3.000000e-02 : f32
    %c0_i32_19 = arith.constant 0 : i32
    %30 = arith.cmpi ne, %29, %c0_i32_19 : i32
    scf.if %30 {
      %c0_20 = arith.constant 0 : index
      %c0_21 = arith.constant 0 : index
      %31 = vector.load %arg4[%c0_20, %c0_21] : memref<1x128xf32, #tpu.memory_space<vmem>>, vector<1x128xf32>
      %c0_22 = arith.constant 0 : index
      %c0_23 = arith.constant 0 : index
      %32 = vector.load %arg6[%c0_22, %c0_23] : memref<8x128xf32, #tpu.memory_space<vmem>>, vector<8x128xf32>
      %cst_24 = arith.constant dense<0.000000e+00> : vector<128xf32>
      %33 = vector.multi_reduction <add>, %32, %cst_24 [0] : vector<8x128xf32> to vector<128xf32>
      %34 = vector.shape_cast %33 : vector<128xf32> to vector<1x128xf32>
      %c0_25 = arith.constant 0 : index
      %c0_26 = arith.constant 0 : index
      %35 = vector.load %arg7[%c0_25, %c0_26] : memref<8x128xf32, #tpu.memory_space<vmem>>, vector<8x128xf32>
      %cst_27 = arith.constant dense<0.000000e+00> : vector<128xf32>
      %36 = vector.multi_reduction <add>, %35, %cst_27 [0] : vector<8x128xf32> to vector<128xf32>
      %37 = vector.shape_cast %36 : vector<128xf32> to vector<1x128xf32>
      %38 = vector.broadcast %cst_18 : f32 to vector<1x128xf32>
      %39 = arith.mulf %38, %31 : vector<1x128xf32>
      %40 = math.exp %39 : vector<1x128xf32>
      %41 = arith.addf %40, %34 : vector<1x128xf32>
      %cst_28 = arith.constant 1.000000e-10 : f32
      %42 = vector.broadcast %cst_28 : f32 to vector<1x128xf32>
      %43 = arith.addf %41, %42 : vector<1x128xf32>
      %44 = math.log %43 : vector<1x128xf32>
      %cst_29 = arith.constant 0.000000e+00 : f32
      %45 = arith.subf %cst_29, %cst_18 : f32
      %46 = vector.broadcast %45 : f32 to vector<1x128xf32>
      %47 = arith.mulf %46, %31 : vector<1x128xf32>
      %48 = math.exp %47 : vector<1x128xf32>
      %49 = arith.addf %48, %37 : vector<1x128xf32>
      %cst_30 = arith.constant 1.000000e-10 : f32
      %50 = vector.broadcast %cst_30 : f32 to vector<1x128xf32>
      %51 = arith.addf %49, %50 : vector<1x128xf32>
      %52 = math.log %51 : vector<1x128xf32>
      %53 = arith.addf %44, %52 : vector<1x128xf32>
      %c0_31 = arith.constant 0 : index
      %c0_32 = arith.constant 0 : index
      %54 = vector.load %arg5[%c0_31, %c0_32] : memref<1x128xf32, #tpu.memory_space<vmem>>, vector<1x128xf32>
      tpu.vector_store %arg5[%c0_31, %c0_32], %53 {strides = array<i32>} : memref<1x128xf32, #tpu.memory_space<vmem>>, vector<1x128xf32>,
    } else {
    }
    return
  }
  func.func @transform_0(%arg0: i32, %arg1: i32) -> (i32, i32) {
    %c0_i32 = arith.constant 0 : i32
    return %arg1, %arg0 : i32, i32
  }
  func.func @transform_1(%arg0: i32, %arg1: i32) -> (i32, i32) {
    %c0_i32 = arith.constant 0 : i32
    return %arg1, %arg0 : i32, i32
  }
  func.func @transform_2(%arg0: i32, %arg1: i32) -> (i32, i32) {
    %c0_i32 = arith.constant 0 : i32
    %c0_i32_0 = arith.constant 0 : i32
    return %c0_i32, %arg0 : i32, i32
  }
  func.func @transform_3(%arg0: i32, %arg1: i32) -> (i32, i32) {
    %c0_i32 = arith.constant 0 : i32
    %c0_i32_0 = arith.constant 0 : i32
    return %c0_i32, %arg0 : i32, i32
  }
}

</mosaic_0001>

<llo_original>
// kernel: tpu_custom_call.1
$region0: #{tpu_custom_call.1}
  #allocation0 [shape = 'u32[]', space=smem, size = 0x4, offset = 0x4, fixed_abs, tag = 'smem constant byte address 0x4 - core index']
  #allocation1 [shape = 'u32[72,128]{1,0:T(1,128)}', space=vmem, size = 0x9000, scoped, tag = 'internal scratch']
  #allocation2 [shape = 'f32[8,128]{1,0:T(8,128)}', space=vmem, size = 0x1000, scoped, tag = 'scratch operand']
  #allocation3 [shape = 'f32[8,128]{1,0:T(8,128)}', space=vmem, size = 0x1000, scoped, tag = 'scratch operand']
  %s0 = inlined_call_operand.hbm [shape: f32[64,256], index: 0, kind: input, shape index: {}]
  %s1 = inlined_call_operand.hbm [shape: s8[64,256], index: 1, kind: input, shape index: {}]
  %s2 = inlined_call_operand.hbm [shape: f32[1,256], index: 2, kind: input, shape index: {}]
  %s3 = inlined_call_operand.hbm [shape: f32[1,256], index: 3, kind: output, shape index: {}]
  %s4 = sld [smem:[#allocation0]]
  $region65: #{tpu_custom_call.1} parent=0
    _
  %s6 = ssub.s32 1, %s4
  %s7 = scalar_select 0, %s6, %s4
  $region1: #{tpu_custom_call.1} parent=0
    #allocation4 [shape = 'u8[32768]{0}', space=vmem, size = 0x8000, scoped, tag = 'input window, operand 0']
    #allocation5 [shape = 's32[2]{0}', space=sflag, size = 0x8, scoped, tag = 'scoped memory for tpu_custom_call.1']
    #allocation6 [shape = 's32[2]{0}', space=sflag, size = 0x8, scoped, tag = 'scoped memory for tpu_custom_call.1']
    #allocation7 [shape = 'u8[8192]{0}', space=vmem, size = 0x2000, scoped, tag = 'input window, operand 1']
    #allocation8 [shape = 's32[2]{0}', space=sflag, size = 0x8, scoped, tag = 'scoped memory for tpu_custom_call.1']
    #allocation9 [shape = 'u8[1024]{0}', space=vmem, size = 0x400, scoped, tag = 'input window, operand 2']
    #allocation10 [shape = 'u8[1024]{0}', space=vmem, size = 0x400, scoped, tag = 'output window, operand 0']
    %8 = vsyncpa [#allocation5], 0
    %s9 = scalar_lea.sflag [#allocation5], 1
    %10 = vsyncpa %s9, 0
    %11 = vsyncpa [#allocation8], 0
    %s12 = scalar_lea.sflag [#allocation8], 1
    %13 = vsyncpa %s12, 0
    %14 = vsyncpa [#allocation6], 0
    %s15 = scalar_lea.sflag [#allocation6], 1
    %16 = vsyncpa %s15, 0
    loop: start=0, step=1, limit=6
    $region2: #{tpu_custom_call.1} parent=1 // loop_pre_header
      _
    $region3: #{tpu_custom_call.1} parent=1 // loop_header
      %s18 = sphi 0, %s22
      %p19 = scmp.ge.s32.totalorder %s18, 6
      %s25 = sphi 0, %s37
      %s26 = sphi 0, %s33
      %s27 = sphi 0, %s25
      %s28 = sphi 0, %s26
      %s29 = sphi 0, %s27
      %s30 = sphi 0, %s28
      %s42 = sphi 0, %s44
      %s45 = sphi 0, %s42
      %s46 = sphi 0, %s45
      %s62 = sphi 0, %s46
      %s70 = sphi 0, %s72
      %s73 = sphi 0, %s70
      %s74 = sphi 0, %s73
      %s90 = sphi 0, %s74
      %s96 = sphi 0, %s98
      %s99 = sphi 0, %s96
      %s100 = sphi 0, %s99
      %s116 = sphi 0, %s100
      %s122 = sphi 0, %s124
      %s125 = sphi 0, %s122
      %s126 = sphi 0, %s125
      %s142 = sphi 0, %s126
    $region4: #{tpu_custom_call.1} parent=1 // loop_header_branch
      %21 = sbr.rel (%p19) target = $region8
    $region5: #{tpu_custom_call.1} parent=1 // loop_body
      %s23 = ssub.s32 %s18, 1
      %s24 = ssub.s32 %s18, 2
      %s31 = sadd.s32 1, %s26
      %p32 = scmp.ge.s32.totalorder %s31, 2
      %s33 = scalar_select %p32, 0, %s31
      %s34 = sadd.s32 1, %s25
      %s35 = scalar_select %p32, %s34, %s25
      %p36 = scmp.ge.s32.totalorder %s35, 2
      %s37 = scalar_select %p36, 0, %s35
      %s38 = ssub.s32 %s26, %s33
      %s39 = ssub.s32 %s25, %s37
      %s40 = sor.u32 %s38, %s39
      %p41 = scmp.eq.s32.totalorder %s40, 0
      %s43 = sadd.s32 %s42, 1
      %s44 = scalar_select %p41, %s42, %s43
      %p47 = pneg %p41
      %p48 = scmp.eq.s32.totalorder %s18, 3
      %p49 = por %p47, %p48
      %p50 = scmp.ne.s32.totalorder %s42, %s45
      %p51 = scmp.eq.s32.totalorder %s18, 0
      %p52 = por %p50, %p51
      %p53 = scmp.ne.s32.totalorder %s42, %s45
      %p54 = scmp.eq.s32.totalorder %s23, 3
      %p55 = por %p53, %p54
      %p56 = scmp.ne.s32.totalorder %s45, %s46
      %p57 = scmp.eq.s32.totalorder %s23, 0
      %p58 = por %p56, %p57
      %p59 = scmp.ne.s32.totalorder %s45, %s46
      %p60 = scmp.eq.s32.totalorder %s24, 3
      %p61 = por %p59, %p60
      %p63 = scmp.ne.s32.totalorder %s46, %s62
      %p64 = scmp.eq.s32.totalorder %s24, 0
      %p65 = por %p63, %p64
      %s66 = ssub.s32 %s26, %s33
      %s67 = ssub.s32 %s25, %s37
      %s68 = sor.u32 %s66, %s67
      %p69 = scmp.eq.s32.totalorder %s68, 0
      %s71 = sadd.s32 %s70, 1
      %s72 = scalar_select %p69, %s70, %s71
      %p75 = pneg %p69
      %p76 = scmp.eq.s32.totalorder %s18, 3
      %p77 = por %p75, %p76
      %p78 = scmp.ne.s32.totalorder %s70, %s73
      %p79 = scmp.eq.s32.totalorder %s18, 0
      %p80 = por %p78, %p79
      %p81 = scmp.ne.s32.totalorder %s70, %s73
      %p82 = scmp.eq.s32.totalorder %s23, 3
      %p83 = por %p81, %p82
      %p84 = scmp.ne.s32.totalorder %s73, %s74
      %p85 = scmp.eq.s32.totalorder %s23, 0
      %p86 = por %p84, %p85
      %p87 = scmp.ne.s32.totalorder %s73, %s74
      %p88 = scmp.eq.s32.totalorder %s24, 3
      %p89 = por %p87, %p88
      %p91 = scmp.ne.s32.totalorder %s74, %s90
      %p92 = scmp.eq.s32.totalorder %s24, 0
      %p93 = por %p91, %p92
      %s94 = ssub.s32 %s25, %s37
      %p95 = scmp.eq.s32.totalorder %s94, 0
      %s97 = sadd.s32 %s96, 1
      %s98 = scalar_select %p95, %s96, %s97
      %p101 = pneg %p95
      %p102 = scmp.eq.s32.totalorder %s18, 3
      %p103 = por %p101, %p102
      %p104 = scmp.ne.s32.totalorder %s96, %s99
      %p105 = scmp.eq.s32.totalorder %s18, 0
      %p106 = por %p104, %p105
      %p107 = scmp.ne.s32.totalorder %s96, %s99
      %p108 = scmp.eq.s32.totalorder %s23, 3
      %p109 = por %p107, %p108
      %p110 = scmp.ne.s32.totalorder %s99, %s100
      %p111 = scmp.eq.s32.totalorder %s23, 0
      %p112 = por %p110, %p111
      %p113 = scmp.ne.s32.totalorder %s99, %s100
      %p114 = scmp.eq.s32.totalorder %s24, 3
      %p115 = por %p113, %p114
      %p117 = scmp.ne.s32.totalorder %s100, %s116
      %p118 = scmp.eq.s32.totalorder %s24, 0
      %p119 = por %p117, %p118
      %s120 = ssub.s32 %s25, %s37
      %p121 = scmp.eq.s32.totalorder %s120, 0
      %s123 = sadd.s32 %s122, 1
      %s124 = scalar_select %p121, %s122, %s123
      %p127 = pneg %p121
      %p128 = scmp.eq.s32.totalorder %s18, 3
      %p129 = por %p127, %p128
      %p130 = scmp.ne.s32.totalorder %s122, %s125
      %p131 = scmp.eq.s32.totalorder %s18, 0
      %p132 = por %p130, %p131
      %p133 = scmp.ne.s32.totalorder %s122, %s125
      %p134 = scmp.eq.s32.totalorder %s23, 3
      %p135 = por %p133, %p134
      %p136 = scmp.ne.s32.totalorder %s125, %s126
      %p137 = scmp.eq.s32.totalorder %s23, 0
      %p138 = por %p136, %p137
      %p139 = scmp.ne.s32.totalorder %s125, %s126
      %p140 = scmp.eq.s32.totalorder %s24, 3
      %p141 = por %p139, %p140
      %p143 = scmp.ne.s32.totalorder %s126, %s142
      %p144 = scmp.eq.s32.totalorder %s24, 0
      %p145 = por %p143, %p144
      %p146 = scmp.le.s32.totalorder 1, %s18
      %p147 = scmp.lt.s32.totalorder %s18, 5
      %p148 = pnand %p146, %p147
      %p149 = pneg %p148
      // Predicated region
      $region9: #{tpu_custom_call.1} parent=5 // pred_check
        _
      $region10: #{tpu_custom_call.1} parent=5 // pred_check_branch
        %151 = sbr.rel (%p148) target = $region12
      $region11: #{tpu_custom_call.1} parent=5 // pred_region
        %s152 = ssub.s32 %s18, 1
      $region12: #{tpu_custom_call.1} parent=5 // pred_fallthru
        _
      %p153 = scmp.lt.s32.totalorder %s18, 4
      // Predicated region
      $region13: #{tpu_custom_call.1} parent=5 // pred_check
        %p154 = pneg %p153
      $region14: #{tpu_custom_call.1} parent=5 // pred_check_branch
        %156 = sbr.rel (%p154) target = $region16
      $region15: #{tpu_custom_call.1} parent=5 // pred_region
        // Predicated region
        $region17: #{tpu_custom_call.1} parent=15 // pred_check
          %p157 = pneg %p52
        $region18: #{tpu_custom_call.1} parent=15 // pred_check_branch
          %159 = sbr.rel (%p157) target = $region20
        $region19: #{tpu_custom_call.1} parent=15 // pred_region
          %s160 = sand.u32 %s42, 1
          %s161 = scalar_lea.sflag [#allocation5], %s160
          %s162 = sand.u32 %s42, 1
          %s163 = smul.addr %s162, 32
          %s164 = scalar_lea.vmem [#allocation4], %s163
          %s165 = smul.u32 4, %s26
          %167 = vsyncadd %s161, 0
          %s168 = smul.addr %s165, 2
          %s169 = sadd.s32 %s25, %s168
          %s170 = smul.addr %s169, 8
          %s171 = scalar_lea.hbm %s0, %s170
          %s172 = sshll.u32 %s171, 4
          %s173 = int_to_ptr.hbm [resolvable:$true] %s172
          %s174 = sshll.u32 %s164, 4
          %s175 = int_to_ptr.vmem [resolvable:$true] %s174
          %180 = dma.hbm_to_vmem [thread:$0]  %s173, 512, %s175, %s161, 256, 128, 8
        $region20: #{tpu_custom_call.1} parent=15 // pred_fallthru
          _
        // Predicated region
        $region21: #{tpu_custom_call.1} parent=15 // pred_check
          %p181 = pneg %p80
        $region22: #{tpu_custom_call.1} parent=15 // pred_check_branch
          %183 = sbr.rel (%p181) target = $region24
        $region23: #{tpu_custom_call.1} parent=15 // pred_region
          %s184 = sand.u32 %s18, 1
          %s185 = scalar_lea.sflag [#allocation8], %s184
          %s186 = sand.u32 %s70, 1
          %s187 = smul.addr %s186, 8
          %s188 = scalar_lea.vmem [#allocation7], %s187
          %190 = vsyncadd %s185, 0
          %s191 = smul.addr %s26, 2
          %s192 = sadd.s32 %s25, %s191
          %s193 = smul.addr %s192, 8
          %s194 = scalar_lea.hbm %s1, %s193
          %s196 = sshll.u32 %s194, 4
          %s197 = int_to_ptr.hbm [resolvable:$true] %s196
          %s198 = sshll.u32 %s188, 4
          %s199 = int_to_ptr.vmem [resolvable:$true] %s198
          %201 = dma.hbm_to_vmem [thread:$0]  %s197, 128, %s199, %s185
        $region24: #{tpu_custom_call.1} parent=15 // pred_fallthru
          _
        // Predicated region
        $region25: #{tpu_custom_call.1} parent=15 // pred_check
          %p202 = pneg %p106
        $region26: #{tpu_custom_call.1} parent=15 // pred_check_branch
          %204 = sbr.rel (%p202) target = $region28
        $region27: #{tpu_custom_call.1} parent=15 // pred_region
          %s205 = sand.u32 %s18, 1
          %s206 = scalar_lea.sflag [#allocation8], %s205
          %s207 = sand.u32 %s96, 1
          %s208 = scalar_lea.vmem [#allocation9], %s207
          %210 = vsyncadd %s206, 0
          %s211 = scalar_lea.hbm %s2, %s25
          %s213 = sshll.u32 %s211, 4
          %s214 = int_to_ptr.hbm [resolvable:$true] %s213
          %s215 = sshll.u32 %s208, 4
          %s216 = int_to_ptr.vmem [resolvable:$true] %s215
          %218 = dma.hbm_to_vmem [thread:$0]  %s214, 16, %s216, %s206
        $region28: #{tpu_custom_call.1} parent=15 // pred_fallthru
          _
      $region16: #{tpu_custom_call.1} parent=5 // pred_fallthru
        _
      %p219 = scmp.le.s32.totalorder 1, %s18
      %p220 = scmp.lt.s32.totalorder %s18, 5
      %p221 = pnand %p219, %p220
      %p222 = pneg %p221
      // Predicated region
      $region29: #{tpu_custom_call.1} parent=5 // pred_check
        _
      $region30: #{tpu_custom_call.1} parent=5 // pred_check_branch
        %224 = sbr.rel (%p221) target = $region32
      $region31: #{tpu_custom_call.1} parent=5 // pred_region
        %s225 = ssub.s32 %s18, 1
        %s226 = sand.u32 %s45, 1
        %s227 = scalar_lea.sflag [#allocation5], %s226
        %s228 = sand.u32 %s45, 1
        %s229 = smul.addr %s228, 32
        %s230 = scalar_lea.vmem [#allocation4], %s229
        // Predicated region
        $region33: #{tpu_custom_call.1} parent=31 // pred_check
          %p231 = pneg %p58
        $region34: #{tpu_custom_call.1} parent=31 // pred_check_branch
          %233 = sbr.rel (%p231) target = $region36
        $region35: #{tpu_custom_call.1} parent=31 // pred_region
          %235 = dma.done %s227, 512
        $region36: #{tpu_custom_call.1} parent=31 // pred_fallthru
          _
        %s236 = sand.u32 %s23, 1
        %s237 = scalar_lea.sflag [#allocation8], %s236
        %s238 = sand.u32 %s73, 1
        %s239 = smul.addr %s238, 8
        %s240 = scalar_lea.vmem [#allocation7], %s239
        // Predicated region
        $region37: #{tpu_custom_call.1} parent=31 // pred_check
          %p241 = pneg %p86
        $region38: #{tpu_custom_call.1} parent=31 // pred_check_branch
          %243 = sbr.rel (%p241) target = $region40
        $region39: #{tpu_custom_call.1} parent=31 // pred_region
          %245 = dma.done %s237, 128
        $region40: #{tpu_custom_call.1} parent=31 // pred_fallthru
          _
        %s246 = sand.u32 %s23, 1
        %s247 = scalar_lea.sflag [#allocation8], %s246
        %s248 = sand.u32 %s99, 1
        %s249 = scalar_lea.vmem [#allocation9], %s248
        // Predicated region
        $region41: #{tpu_custom_call.1} parent=31 // pred_check
          %p250 = pneg %p112
        $region42: #{tpu_custom_call.1} parent=31 // pred_check_branch
          %252 = sbr.rel (%p250) target = $region44
        $region43: #{tpu_custom_call.1} parent=31 // pred_region
          %254 = dma.done %s247, 16
        $region44: #{tpu_custom_call.1} parent=31 // pred_fallthru
          _
        %s255 = sand.u32 %s45, 1
        %s256 = scalar_lea.sflag [#allocation5], %s255
        %s257 = sand.u32 %s45, 1
        %s258 = smul.addr %s257, 32
        %s259 = scalar_lea.vmem [#allocation4], %s258
        %p260 = pneg %p58
        %p261 = pneg %p55
        %s262 = sand.u32 %s23, 1
        %s263 = scalar_lea.sflag [#allocation8], %s262
        %s264 = sand.u32 %s73, 1
        %s265 = smul.addr %s264, 8
        %s266 = scalar_lea.vmem [#allocation7], %s265
        %p267 = pneg %p86
        %p268 = pneg %p83
        %s269 = sand.u32 %s23, 1
        %s270 = scalar_lea.sflag [#allocation8], %s269
        %s271 = sand.u32 %s99, 1
        %s272 = scalar_lea.vmem [#allocation9], %s271
        %p273 = pneg %p112
        %p274 = pneg %p109
        %p275 = pneg %p138
        %p276 = pneg %p135
        %s277 = sand.u32 %s125, 1
        %s278 = scalar_lea.sflag [#allocation6], %s277
        %s279 = sand.u32 %s125, 1
        %s280 = scalar_lea.vmem [#allocation10], %s279
        %s281 = smul.u32 4, %s28
        %p282 = scmp.eq.s32.totalorder %s28, 0
        // Predicated region
        $region45: #{tpu_custom_call.1} parent=31 // pred_check
          %p283 = pneg %p282
        $region46: #{tpu_custom_call.1} parent=31 // pred_check_branch
          %285 = sbr.rel (%p283) target = $region48
        $region47: #{tpu_custom_call.1} parent=31 // pred_region
          %286 = vst [vmem:[#allocation2] sm:$0xff] 0.0
          %287 = vst [vmem:[#allocation3] sm:$0xff] 0.0
        $region48: #{tpu_custom_call.1} parent=31 // pred_fallthru
          _
        %v288 = vld [vmem:[%s230] sm:$0xff]
        %v289 = vld [vmem:[%s230 + $0x8] sm:$0xff]
        %v290 = vld [vmem:[%s230 + $0x10] sm:$0xff]
        %v291 = vld [vmem:[%s230 + $0x18] sm:$0xff]
        %v292 = vld [vmem:[%s240] sm:$0xff]
        %v293 = vunpack.c.0.s8 %v292
        %v294 = vunpack.c.1.s8 %v292
        %v295 = vunpack.c.2.s8 %v292
        %v296 = vunpack.c.3.s8 %v292
        %vm297 = vcmp.eq.s32.totalorder %v293, 0
        %vm298 = vcmp.eq.s32.totalorder %v294, 0
        %vm299 = vcmp.eq.s32.totalorder %v295, 0
        %vm300 = vcmp.eq.s32.totalorder %v296, 0
        %v301 = vsub.f32 0.0, %v288
        %v302 = vsub.f32 0.0, %v289
        %v303 = vsub.f32 0.0, %v290
        %v304 = vsub.f32 0.0, %v291
        %v305 = vsel %vm297, %v288, %v301
        %v306 = vsel %vm298, %v289, %v302
        %v307 = vsel %vm299, %v290, %v303
        %v308 = vsel %vm300, %v291, %v304
        %v309 = vmul.f32 %v305, 0.03
        %v310 = vmul.f32 %v306, 0.03
        %v311 = vmul.f32 %v307, 0.03
        %v312 = vmul.f32 %v308, 0.03
        %v313 = vmul.f32 %v309, 1.442695
        %v314 = vpow.pop %v313
        %v315 = vmul.f32 %v310, 1.442695
        %v316 = vpow.pop %v315
        %v317 = vmul.f32 %v311, 1.442695
        %v318 = vpow.pop %v317
        %v319 = vmul.f32 %v312, 1.442695
        %v320 = vpow.pop %v319
        %v321 = vsel %vm297, %v314, 1.0
        %v322 = vsel %vm298, %v316, 1.0
        %v323 = vsel %vm299, %v318, 1.0
        %v324 = vsel %vm300, %v320, 1.0
        %v325 = vsel %vm297, 1.0, %v314
        %v326 = vsel %vm298, 1.0, %v316
        %v327 = vsel %vm299, 1.0, %v318
        %v328 = vsel %vm300, 1.0, %v320
        %v329 = vld [vmem:[#allocation2] sm:$0xff]
        %v330 = vadd.f32 %v321, %v322
        %v331 = vadd.f32 %v330, %v323
        %v332 = vadd.f32 %v331, %v324
        %v333 = vadd.f32 %v329, %v332
        %334 = vst [vmem:[#allocation2] sm:$0xff] %v333
        %v335 = vld [vmem:[#allocation3] sm:$0xff]
        %v336 = vadd.f32 %v325, %v326
        %v337 = vadd.f32 %v336, %v327
        %v338 = vadd.f32 %v337, %v328
        %v339 = vadd.f32 %v335, %v338
        %340 = vst [vmem:[#allocation3] sm:$0xff] %v339
        %p341 = scmp.eq.s32.totalorder %s28, 1
        // Predicated region
        $region49: #{tpu_custom_call.1} parent=31 // pred_check
          %p342 = pneg %p341
        $region50: #{tpu_custom_call.1} parent=31 // pred_check_branch
          %344 = sbr.rel (%p342) target = $region52
        $region51: #{tpu_custom_call.1} parent=31 // pred_region
          %v345 = vld [vmem:[%s249] sm:$0x1]
          %v346 = vld [vmem:[#allocation2] sm:$0xff]
          %v347 = vrot.slane %v346, 4
          %v348 = vadd.f32 %v346, %v347
          %v349 = vrot.slane %v348, 2
          %v350 = vadd.f32 %v348, %v349
          %v351 = vrot.slane %v350, 1
          %v352 = vadd.f32 %v350, %v351
          %v353 = vld [vmem:[#allocation3] sm:$0xff]
          %v354 = vrot.slane %v353, 4
          %v355 = vadd.f32 %v353, %v354
          %v356 = vrot.slane %v355, 2
          %v357 = vadd.f32 %v355, %v356
          %v358 = vrot.slane %v357, 1
          %v359 = vadd.f32 %v357, %v358
          %v360 = vmul.f32 %v345, 0.03
          %v361 = vmul.f32 %v360, 1.442695
          %v362 = vpow.pop %v361
          %v363 = vadd.f32 %v362, %v352
          %v364 = vadd.f32 %v363, 1e-10
          %v365 = vlog2.pop %v364
          %v366 = vmul.f32 %v365, 0.6931472
          %v367 = vmul.f32 %v345, -0.03
          %v368 = vmul.f32 %v367, 1.442695
          %v369 = vpow.pop %v368
          %v370 = vadd.f32 %v369, %v359
          %v371 = vadd.f32 %v370, 1e-10
          %v372 = vlog2.pop %v371
          %v373 = vmul.f32 %v372, 0.6931472
          %v374 = vadd.f32 %v366, %v373
          %375 = vst [vmem:[%s280] sm:$0x1] %v374
        $region52: #{tpu_custom_call.1} parent=31 // pred_fallthru
          _
        %s376 = sand.u32 %s125, 1
        %s377 = scalar_lea.sflag [#allocation6], %s376
        %s378 = sand.u32 %s125, 1
        %s379 = scalar_lea.vmem [#allocation10], %s378
        // Predicated region
        $region53: #{tpu_custom_call.1} parent=31 // pred_check
          %p380 = pneg %p135
        $region54: #{tpu_custom_call.1} parent=31 // pred_check_branch
          %382 = sbr.rel (%p380) target = $region56
        $region55: #{tpu_custom_call.1} parent=31 // pred_region
          %384 = vsyncadd %s377, 0
          %s385 = scalar_lea.hbm %s3, %s27
          %s387 = sshll.u32 %s379, 4
          %s388 = int_to_ptr.vmem [resolvable:$true] %s387
          %s389 = sshll.u32 %s385, 4
          %s390 = int_to_ptr.hbm [resolvable:$true] %s389
          %392 = dma.vmem_to_hbm [thread:$0]  %s388, 16, %s390, %s377
        $region56: #{tpu_custom_call.1} parent=31 // pred_fallthru
          _
      $region32: #{tpu_custom_call.1} parent=5 // pred_fallthru
        _
      %p393 = scmp.le.s32.totalorder 2, %s18
      // Predicated region
      $region57: #{tpu_custom_call.1} parent=5 // pred_check
        %p394 = pneg %p393
      $region58: #{tpu_custom_call.1} parent=5 // pred_check_branch
        %396 = sbr.rel (%p394) target = $region60
      $region59: #{tpu_custom_call.1} parent=5 // pred_region
        %s397 = ssub.s32 %s18, 2
        // Predicated region
        $region61: #{tpu_custom_call.1} parent=59 // pred_check
          %p398 = pneg %p141
        $region62: #{tpu_custom_call.1} parent=59 // pred_check_branch
          %400 = sbr.rel (%p398) target = $region64
        $region63: #{tpu_custom_call.1} parent=59 // pred_region
          %s401 = sand.u32 %s126, 1
          %s402 = scalar_lea.sflag [#allocation6], %s401
          %s403 = sand.u32 %s126, 1
          %s404 = scalar_lea.vmem [#allocation10], %s403
          %406 = dma.done %s402, 16
        $region64: #{tpu_custom_call.1} parent=59 // pred_fallthru
          _
      $region60: #{tpu_custom_call.1} parent=5 // pred_fallthru
        _
    $region6: #{tpu_custom_call.1} parent=1 // loop_footer
      %s22 = sadd.s32 1, %s18
    $region7: #{tpu_custom_call.1} parent=1 // loop_footer_branch
      %17 = sbr.rel target = $region3
    $region8: #{tpu_custom_call.1} parent=1 // loop_exit
      _
    %407 = vsyncpa [#allocation5], 1
    %s408 = scalar_lea.sflag [#allocation5], 1
    %409 = vsyncpa %s408, 1
    %410 = vsyncpa [#allocation8], 1
    %s411 = scalar_lea.sflag [#allocation8], 1
    %412 = vsyncpa %s411, 1
    %413 = vsyncpa [#allocation6], 1
    %s414 = scalar_lea.sflag [#allocation6], 1
    %415 = vsyncpa %s414, 1

</llo_original>
